<compile_context>
chip_gen: v7x
topology: tpu7x:2x2x1
jax: 0.10.0
libtpu: 0.0.40
codegen_flags: <defaults>
</compile_context>

<pallas_src>
import jax
import jax.numpy as jnp
from jax.experimental import pallas as pl
from jax.experimental.pallas import tpu as pltpu


def _round_up(x, m):
    return ((x + m - 1) // m) * m


def mlp_kernel(x_ref, w1_ref, b1_ref, w2_ref, b2_ref, w3_ref, b3_ref,
               o_ref, acc_ref):
    """One (batch-tile, K-tile) grid step of the fused MLP."""
    k = pl.program_id(1)

    @pl.when(k == 0)
    def _init():
        # Fold the layer-1 bias into the accumulator init (saves a VPU pass
        # and avoids re-materializing the broadcast per iteration).
        acc_ref[...] = jnp.broadcast_to(b1_ref[...], acc_ref.shape)

    # Layer-1 partial matmul: bf16 operands, f32 accumulation on the MXU.
    acc_ref[...] += jnp.dot(x_ref[...], w1_ref[...],
                            preferred_element_type=jnp.float32)

    @pl.when(k == pl.num_programs(1) - 1)
    def _finalize():
        # ReLU in f32. Dropout(0.5) is identity in eval mode.
        h1 = jnp.maximum(acc_ref[...], 0.0)
        # Layer 2: Linear + ReLU. Dropout(0.2) is identity in eval mode.
        h2 = jnp.dot(h1.astype(w2_ref.dtype), w2_ref[...],
                     preferred_element_type=jnp.float32)
        h2 = jnp.maximum(h2 + b2_ref[...], 0.0)
        # Layer 3: Linear. Output lanes are padded to 128; sliced in wrapper.
        out = jnp.dot(h2.astype(w3_ref.dtype), w3_ref[...],
                      preferred_element_type=jnp.float32)
        o_ref[...] = (out + b3_ref[...]).astype(o_ref.dtype)


def common_mlp_forward(x_nchw, params, *, tm=128, tk=512):
    """x_nchw: (N, C, H, W) float32. Returns (N, output_size) float32."""
    w1, b1, w2, b2, w3, b3 = params
    n = x_nchw.shape[0]
    x = x_nchw.reshape(n, -1)                      # nn.Flatten()
    K, H1 = w1.shape
    H2 = w2.shape[1]
    OUT = w3.shape[1]
    assert x.shape[1] == K

    # --- Tile / padded sizes -------------------------------------------------
    tm = min(tm, _round_up(n, 8))                  # batch tile (sublane mult.)
    m_pad = _round_up(n, tm)
    tk = min(tk, _round_up(K, 128))                # K tile (lane multiple)
    k_pad = _round_up(K, tk)
    out_pad = _round_up(OUT, 128)                  # lane-dense output tile

    # --- bf16 casts + zero-padding (pads contribute nothing to the dots) -----
    xb = jnp.zeros((m_pad, k_pad), jnp.bfloat16).at[:n, :K].set(
        x.astype(jnp.bfloat16))
    w1b = jnp.zeros((k_pad, H1), jnp.bfloat16).at[:K, :].set(
        w1.astype(jnp.bfloat16))
    w2b = w2.astype(jnp.bfloat16)
    w3b = jnp.zeros((H2, out_pad), jnp.bfloat16).at[:, :OUT].set(
        w3.astype(jnp.bfloat16))
    b1f = b1.astype(jnp.float32)
    b2f = b2.astype(jnp.float32)
    b3f = jnp.zeros((1, out_pad), jnp.float32).at[:, :OUT].set(
        b3.astype(jnp.float32))

    grid = (m_pad // tm, k_pad // tk)              # reduction (K) axis last

    flops = 2 * m_pad * (k_pad * H1 + H1 * H2 + H2 * out_pad)
    bytes_accessed = int(
        xb.size * 2 + w1b.size * 2 + w2b.size * 2 + w3b.size * 2
        + (b1f.size + b2f.size + b3f.size) * 4
        + m_pad * out_pad * 4)

    out_padded = pl.pallas_call(
        mlp_kernel,
        out_shape=jax.ShapeDtypeStruct((m_pad, out_pad), jnp.float32),
        grid=grid,
        in_specs=[
            pl.BlockSpec((tm, tk), lambda m, k: (m, k)),       # x
            pl.BlockSpec((tk, H1), lambda m, k: (k, 0)),       # w1 (K-tiled)
            pl.BlockSpec((1, H1), lambda m, k: (0, 0)),        # b1
            pl.BlockSpec((H1, H2), lambda m, k: (0, 0)),       # w2 (resident)
            pl.BlockSpec((1, H2), lambda m, k: (0, 0)),        # b2
            pl.BlockSpec((H2, out_pad), lambda m, k: (0, 0)),  # w3 (resident)
            pl.BlockSpec((1, out_pad), lambda m, k: (0, 0)),   # b3
        ],
        out_specs=pl.BlockSpec((tm, out_pad), lambda m, k: (m, 0)),
        scratch_shapes=[pltpu.VMEM((tm, H1), jnp.float32)],    # layer-1 acc
        compiler_params=pltpu.CompilerParams(
            dimension_semantics=("parallel", "arbitrary"),
            vmem_limit_bytes=32 * 1024 * 1024),
        cost_estimate=pl.CostEstimate(
            flops=flops, transcendentals=0, bytes_accessed=bytes_accessed),
    )(xb, w1b, b1f, w2b, b2f, w3b, b3f)

    return out_padded[:n, :OUT]


def init_params(key, input_size, output_size):
    """Deterministic init matching the torch module's layer shapes."""
    h1 = input_size // 16
    h2 = input_size // 256
    ks = jax.random.split(key, 6)

    def linear(kw, kb, fan_in, fan_out):
        bound = 1.0 / jnp.sqrt(fan_in)
        w = jax.random.uniform(kw, (fan_in, fan_out), jnp.float32, -bound, bound)
        b = jax.random.uniform(kb, (1, fan_out), jnp.float32, -bound, bound)
        return w, b

    w1, b1 = linear(ks[0], ks[1], input_size, h1)
    w2, b2 = linear(ks[2], ks[3], h1, h2)
    w3, b3 = linear(ks[4], ks[5], h2, output_size)
    return (w1, b1, w2, b2, w3, b3)


def reference_forward(x_nchw, params):
    """Plain-JAX f32 reference for sanity checking."""
    w1, b1, w2, b2, w3, b3 = params
    x = x_nchw.reshape(x_nchw.shape[0], -1)
    h1 = jnp.maximum(x @ w1 + b1, 0.0)
    h2 = jnp.maximum(h1 @ w2 + b2, 0.0)
    return h2 @ w3 + b3


if __name__ == "__main__":
    key = jax.random.PRNGKey(0)
    k_x, k_p = jax.random.split(key)

    # input_size must be divisible by 256: use C*H*W = 4*32*32 = 4096.
    batch, C, H, W = 2, 4, 32, 32
    input_size = C * H * W      # 4096 -> hidden1=256, hidden2=16
    output_size = 10

    x = jax.random.normal(k_x, (batch, C, H, W), dtype=jnp.float32)
    params = init_params(k_p, input_size, output_size)

    out = jax.block_until_ready(common_mlp_forward(x, params))
    ref = reference_forward(x, params)

    assert out.shape == (batch, output_size)
    # bf16 operands (f32 accumulation) -> loosened tolerance vs f32 reference.
    assert jnp.allclose(out, ref, atol=3e-2, rtol=3e-2), float(
        jnp.max(jnp.abs(out - ref)))

    print("KERNEL_OK")
</pallas_src>

<mosaic_0001>
module attributes {stable_mosaic.version = 11 : i64} {
  func.func @mlp_kernel(%arg0: i32, %arg1: i32, %arg2: memref<8x512xbf16, #tpu.memory_space<vmem>>, %arg3: memref<512x256xbf16, #tpu.memory_space<vmem>>, %arg4: memref<1x256xf32, #tpu.memory_space<vmem>>, %arg5: memref<256x16xbf16, #tpu.memory_space<vmem>>, %arg6: memref<1x16xf32, #tpu.memory_space<vmem>>, %arg7: memref<16x128xbf16, #tpu.memory_space<vmem>>, %arg8: memref<1x128xf32, #tpu.memory_space<vmem>>, %arg9: memref<8x128xf32, #tpu.memory_space<vmem>>, %arg10: memref<8x256xf32, #tpu.memory_space<vmem>>) attributes {dimension_semantics = [#tpu.dimension_semantics<parallel>, #tpu.dimension_semantics<arbitrary>], iteration_bounds = array<i64: 1, 8>, scalar_prefetch = 0 : i64, scratch_operands = 1 : i64, tpu.core_type = #tpu.core_type<tc>, window_params = [{transform_indices = @transform_0, window_bounds = array<i64: 8, 512>}, {transform_indices = @transform_1, window_bounds = array<i64: 512, 256>}, {pipeline_mode = #tpu.pipeline_mode<synchronous>, transform_indices = @transform_2, window_bounds = array<i64: 1, 256>}, {pipeline_mode = #tpu.pipeline_mode<synchronous>, transform_indices = @transform_3, window_bounds = array<i64: 256, 16>}, {pipeline_mode = #tpu.pipeline_mode<synchronous>, transform_indices = @transform_4, window_bounds = array<i64: 1, 16>}, {pipeline_mode = #tpu.pipeline_mode<synchronous>, transform_indices = @transform_5, window_bounds = array<i64: 16, 128>}, {pipeline_mode = #tpu.pipeline_mode<synchronous>, transform_indices = @transform_6, window_bounds = array<i64: 1, 128>}, {transform_indices = @transform_7, window_bounds = array<i64: 8, 128>}]} {
    %c0_i32 = arith.constant 0 : i32
    %0 = arith.cmpi eq, %arg1, %c0_i32 : i32
    %1 = arith.extui %0 : i1 to i32
    %c0_i32_0 = arith.constant 0 : i32
    %2 = arith.cmpi ne, %1, %c0_i32_0 : i32
    scf.if %2 {
      %c0_9 = arith.constant 0 : index
      %c0_10 = arith.constant 0 : index
      %12 = vector.load %arg4[%c0_9, %c0_10] : memref<1x256xf32, #tpu.memory_space<vmem>>, vector<1x256xf32>
      %13 = vector.shape_cast %12 : vector<1x256xf32> to vector<1x256xf32>
      %14 = vector.broadcast %13 : vector<1x256xf32> to vector<8x256xf32>
      %c0_11 = arith.constant 0 : index
      %c0_12 = arith.constant 0 : index
      %15 = vector.load %arg10[%c0_11, %c0_12] : memref<8x256xf32, #tpu.memory_space<vmem>>, vector<8x256xf32>
      tpu.vector_store %arg10[%c0_11, %c0_12], %14 {strides = array<i32>} : memref<8x256xf32, #tpu.memory_space<vmem>>, vector<8x256xf32>,
    } else {
    }
    %c0 = arith.constant 0 : index
    %c0_1 = arith.constant 0 : index
    %3 = vector.load %arg10[%c0, %c0_1] : memref<8x256xf32, #tpu.memory_space<vmem>>, vector<8x256xf32>
    %c0_2 = arith.constant 0 : index
    %c0_3 = arith.constant 0 : index
    %4 = vector.load %arg2[%c0_2, %c0_3] : memref<8x512xbf16, #tpu.memory_space<vmem>>, vector<8x512xbf16>
    %c0_4 = arith.constant 0 : index
    %c0_5 = arith.constant 0 : index
    %5 = vector.load %arg3[%c0_4, %c0_5] : memref<512x256xbf16, #tpu.memory_space<vmem>>, vector<512x256xbf16>
    %cst = arith.constant dense<0.000000e+00> : vector<8x256xf32>
    %6 = tpu.matmul %4, %5, %cst {dimension_numbers = #tpu.dot_dimension_numbers<[1], [0], [0], [1], [0, 0, 1, 1], [], []>} : vector<8x512xbf16>, vector<512x256xbf16>, vector<8x256xf32> -> vector<8x256xf32>
    %7 = arith.addf %3, %6 : vector<8x256xf32>
    %c0_6 = arith.constant 0 : index
    %c0_7 = arith.constant 0 : index
    %8 = vector.load %arg10[%c0_6, %c0_7] : memref<8x256xf32, #tpu.memory_space<vmem>>, vector<8x256xf32>
    tpu.vector_store %arg10[%c0_6, %c0_7], %7 {strides = array<i32>} : memref<8x256xf32, #tpu.memory_space<vmem>>, vector<8x256xf32>,
    %c7_i32 = arith.constant 7 : i32
    %9 = arith.cmpi eq, %arg1, %c7_i32 : i32
    %10 = arith.extui %9 : i1 to i32
    %c0_i32_8 = arith.constant 0 : i32
    %11 = arith.cmpi ne, %10, %c0_i32_8 : i32
    scf.if %11 {
      %c0_9 = arith.constant 0 : index
      %c0_10 = arith.constant 0 : index
      %12 = vector.load %arg10[%c0_9, %c0_10] : memref<8x256xf32, #tpu.memory_space<vmem>>, vector<8x256xf32>
      %cst_11 = arith.constant 0.000000e+00 : f32
      %13 = vector.broadcast %cst_11 : f32 to vector<8x256xf32>
      %14 = arith.maximumf %12, %13 : vector<8x256xf32>
      %15 = arith.truncf %14 : vector<8x256xf32> to vector<8x256xbf16>
      %c0_12 = arith.constant 0 : index
      %c0_13 = arith.constant 0 : index
      %16 = vector.load %arg5[%c0_12, %c0_13] : memref<256x16xbf16, #tpu.memory_space<vmem>>, vector<256x16xbf16>
      %cst_14 = arith.constant dense<0.000000e+00> : vector<8x16xf32>
      %17 = tpu.matmul %15, %16, %cst_14 {dimension_numbers = #tpu.dot_dimension_numbers<[1], [0], [0], [1], [0, 0, 1, 1], [], []>} : vector<8x256xbf16>, vector<256x16xbf16>, vector<8x16xf32> -> vector<8x16xf32>
      %c0_15 = arith.constant 0 : index
      %c0_16 = arith.constant 0 : index
      %18 = vector.load %arg6[%c0_15, %c0_16] : memref<1x16xf32, #tpu.memory_space<vmem>>, vector<1x16xf32>
      %19 = vector.broadcast %18 : vector<1x16xf32> to vector<8x16xf32>
      %20 = arith.addf %17, %19 : vector<8x16xf32>
      %cst_17 = arith.constant 0.000000e+00 : f32
      %21 = vector.broadcast %cst_17 : f32 to vector<8x16xf32>
      %22 = arith.maximumf %20, %21 : vector<8x16xf32>
      %23 = arith.truncf %22 : vector<8x16xf32> to vector<8x16xbf16>
      %c0_18 = arith.constant 0 : index
      %c0_19 = arith.constant 0 : index
      %24 = vector.load %arg7[%c0_18, %c0_19] : memref<16x128xbf16, #tpu.memory_space<vmem>>, vector<16x128xbf16>
      %cst_20 = arith.constant dense<0.000000e+00> : vector<8x128xf32>
      %25 = tpu.matmul %23, %24, %cst_20 {dimension_numbers = #tpu.dot_dimension_numbers<[1], [0], [0], [1], [0, 0, 1, 1], [], []>} : vector<8x16xbf16>, vector<16x128xbf16>, vector<8x128xf32> -> vector<8x128xf32>
      %c0_21 = arith.constant 0 : index
      %c0_22 = arith.constant 0 : index
      %26 = vector.load %arg8[%c0_21, %c0_22] : memref<1x128xf32, #tpu.memory_space<vmem>>, vector<1x128xf32>
      %27 = vector.broadcast %26 : vector<1x128xf32> to vector<8x128xf32>
      %28 = arith.addf %25, %27 : vector<8x128xf32>
      %c0_23 = arith.constant 0 : index
      %c0_24 = arith.constant 0 : index
      %29 = vector.load %arg9[%c0_23, %c0_24] : memref<8x128xf32, #tpu.memory_space<vmem>>, vector<8x128xf32>
      tpu.vector_store %arg9[%c0_23, %c0_24], %28 {strides = array<i32>} : memref<8x128xf32, #tpu.memory_space<vmem>>, vector<8x128xf32>,
    } else {
    }
    return
  }
  func.func @transform_0(%arg0: i32, %arg1: i32) -> (i32, i32) {
    %c0_i32 = arith.constant 0 : i32
    return %arg0, %arg1 : i32, i32
  }
  func.func @transform_1(%arg0: i32, %arg1: i32) -> (i32, i32) {
    %c0_i32 = arith.constant 0 : i32
    %c0_i32_0 = arith.constant 0 : i32
    return %arg1, %c0_i32 : i32, i32
  }
  func.func @transform_2(%arg0: i32, %arg1: i32) -> (i32, i32) {
    %c0_i32 = arith.constant 0 : i32
    %c0_i32_0 = arith.constant 0 : i32
    %c0_i32_1 = arith.constant 0 : i32
    return %c0_i32, %c0_i32_0 : i32, i32
  }
  func.func @transform_3(%arg0: i32, %arg1: i32) -> (i32, i32) {
    %c0_i32 = arith.constant 0 : i32
    %c0_i32_0 = arith.constant 0 : i32
    %c0_i32_1 = arith.constant 0 : i32
    return %c0_i32, %c0_i32_0 : i32, i32
  }
  func.func @transform_4(%arg0: i32, %arg1: i32) -> (i32, i32) {
    %c0_i32 = arith.constant 0 : i32
    %c0_i32_0 = arith.constant 0 : i32
    %c0_i32_1 = arith.constant 0 : i32
    return %c0_i32, %c0_i32_0 : i32, i32
  }
  func.func @transform_5(%arg0: i32, %arg1: i32) -> (i32, i32) {
    %c0_i32 = arith.constant 0 : i32
    %c0_i32_0 = arith.constant 0 : i32
    %c0_i32_1 = arith.constant 0 : i32
    return %c0_i32, %c0_i32_0 : i32, i32
  }
  func.func @transform_6(%arg0: i32, %arg1: i32) -> (i32, i32) {
    %c0_i32 = arith.constant 0 : i32
    %c0_i32_0 = arith.constant 0 : i32
    %c0_i32_1 = arith.constant 0 : i32
    return %c0_i32, %c0_i32_0 : i32, i32
  }
  func.func @transform_7(%arg0: i32, %arg1: i32) -> (i32, i32) {
    %c0_i32 = arith.constant 0 : i32
    %c0_i32_0 = arith.constant 0 : i32
    return %arg0, %c0_i32 : i32, i32
  }
}

</mosaic_0001>

<llo_original>
// kernel: tpu_custom_call.1
$region0: #{tpu_custom_call.1}
  #allocation0 [shape = 'u32[]', space=smem, size = 0x4, offset = 0x4, fixed_abs, tag = 'smem constant byte address 0x4 - core index']
  #allocation1 [shape = 'u32[144,128]{1,0:T(1,128)}', space=vmem, size = 0x12000, scoped, tag = 'internal scratch']
  #allocation2 [shape = 'f32[8,256]{1,0:T(8,128)}', space=vmem, size = 0x2000, scoped, tag = 'scratch operand']
  %s0 = inlined_call_operand.hbm [shape: bf16[8,4096], index: 0, kind: input, shape index: {}]
  %s1 = inlined_call_operand.hbm [shape: bf16[4096,256], index: 1, kind: input, shape index: {}]
  %s2 = inlined_call_operand.hbm [shape: f32[1,256], index: 2, kind: input, shape index: {}]
  %s3 = inlined_call_operand.vmem [shape: bf16[256,16], index: 3, kind: input, shape index: {}]
  %s4 = inlined_call_operand.hbm [shape: f32[1,16], index: 4, kind: input, shape index: {}]
  %s5 = inlined_call_operand.hbm [shape: bf16[16,128], index: 5, kind: input, shape index: {}]
  %s6 = inlined_call_operand.hbm [shape: f32[1,128], index: 6, kind: input, shape index: {}]
  %s7 = inlined_call_operand.hbm [shape: f32[8,128], index: 7, kind: output, shape index: {}]
  %s8 = sld [smem:[#allocation0]]
  $region93: #{tpu_custom_call.1} parent=0
    _
  %s10 = ssub.s32 1, %s8
  %s11 = scalar_select 0, %s10, %s8
  $region1: #{tpu_custom_call.1} parent=0
    #allocation3 [shape = 'u8[16384]{0}', space=vmem, size = 0x4000, scoped, tag = 'input window, operand 0']
    #allocation4 [shape = 's32[2]{0}', space=sflag, size = 0x8, scoped, tag = 'scoped memory for tpu_custom_call.1']
    #allocation5 [shape = 's32[2]{0}', space=sflag, size = 0x8, scoped, tag = 'scoped memory for tpu_custom_call.1']
    #allocation6 [shape = 'u8[524288]{0}', space=vmem, size = 0x80000, scoped, tag = 'input window, operand 1']
    #allocation7 [shape = 's32[2]{0}', space=sflag, size = 0x8, scoped, tag = 'scoped memory for tpu_custom_call.1']
    #allocation8 [shape = 'u8[1024]{0}', space=vmem, size = 0x400, scoped, tag = 'input window, operand 2, single buffered']
    #allocation9 [shape = 'u8[512]{0}', space=vmem, size = 0x400, scoped, tag = 'input window, operand 4, single buffered']
    #allocation10 [shape = 's32[1]{0}', space=sflag, size = 0x4, scoped, tag = 'scoped memory for tpu_custom_call.1']
    #allocation11 [shape = 'u8[4096]{0}', space=vmem, size = 0x1000, scoped, tag = 'input window, operand 5, single buffered']
    #allocation12 [shape = 'u8[512]{0}', space=vmem, size = 0x400, scoped, tag = 'input window, operand 6, single buffered']
    #allocation13 [shape = 's32[1]{0}', space=sflag, size = 0x4, scoped, tag = 'scoped memory for tpu_custom_call.1']
    #allocation14 [shape = 'u8[4096]{0}', space=vmem, size = 0x1000, scoped, tag = 'output window, operand 0, single buffered']
    %12 = vsyncpa [#allocation4], 0
    %s13 = scalar_lea.sflag [#allocation4], 1
    %14 = vsyncpa %s13, 0
    %15 = vsyncpa [#allocation7], 0
    %s16 = scalar_lea.sflag [#allocation7], 1
    %17 = vsyncpa %s16, 0
    %18 = vsyncpa [#allocation10], 0
    %19 = vsyncpa [#allocation13], 0
    %20 = vsyncpa [#allocation5], 0
    loop: start=0, step=1, limit=10
    $region2: #{tpu_custom_call.1} parent=1 // loop_pre_header
      _
    $region3: #{tpu_custom_call.1} parent=1 // loop_header
      %s22 = sphi 0, %s26
      %p23 = scmp.ge.s32.totalorder %s22, 10
      %s29 = sphi 0, %s41
      %s30 = sphi 0, %s37
      %s31 = sphi 0, %s29
      %s32 = sphi 0, %s30
      %s33 = sphi 0, %s31
      %s34 = sphi 0, %s32
      %s46 = sphi 0, %s48
      %s49 = sphi 0, %s46
      %s50 = sphi 0, %s49
      %s66 = sphi 0, %s50
      %s72 = sphi 0, %s74
      %s75 = sphi 0, %s72
      %s76 = sphi 0, %s75
      %s92 = sphi 0, %s76
      %s96 = sphi 0, %s96
      %s98 = sphi 0, %s96
      %s99 = sphi 0, %s98
      %s113 = sphi 0, %s99
      %s117 = sphi 0, %s117
      %s119 = sphi 0, %s117
      %s120 = sphi 0, %s119
      %s134 = sphi 0, %s120
      %s138 = sphi 0, %s138
      %s140 = sphi 0, %s138
      %s141 = sphi 0, %s140
      %s155 = sphi 0, %s141
      %s159 = sphi 0, %s159
      %s161 = sphi 0, %s159
      %s162 = sphi 0, %s161
      %s176 = sphi 0, %s162
      %s180 = sphi 0, %s180
      %s182 = sphi 0, %s180
      %s183 = sphi 0, %s182
      %s197 = sphi 0, %s183
      %s203 = sphi 0, %s205
      %s206 = sphi 0, %s203
      %s207 = sphi 0, %s206
      %s223 = sphi 0, %s207
    $region4: #{tpu_custom_call.1} parent=1 // loop_header_branch
      %25 = sbr.rel (%p23) target = $region8
    $region5: #{tpu_custom_call.1} parent=1 // loop_body
      %s27 = ssub.s32 %s22, 1
      %s28 = ssub.s32 %s22, 2
      %s35 = sadd.s32 1, %s30
      %p36 = scmp.ge.s32.totalorder %s35, 8
      %s37 = scalar_select %p36, 0, %s35
      %s38 = sadd.s32 1, %s29
      %s39 = scalar_select %p36, %s38, %s29
      %p40 = scmp.ge.s32.totalorder %s39, 1
      %s41 = scalar_select %p40, 0, %s39
      %s42 = ssub.s32 %s29, %s41
      %s43 = ssub.s32 %s30, %s37
      %s44 = sor.u32 %s42, %s43
      %p45 = scmp.eq.s32.totalorder %s44, 0
      %s47 = sadd.s32 %s46, 1
      %s48 = scalar_select %p45, %s46, %s47
      %p51 = pneg %p45
      %p52 = scmp.eq.s32.totalorder %s22, 7
      %p53 = por %p51, %p52
      %p54 = scmp.ne.s32.totalorder %s46, %s49
      %p55 = scmp.eq.s32.totalorder %s22, 0
      %p56 = por %p54, %p55
      %p57 = scmp.ne.s32.totalorder %s46, %s49
      %p58 = scmp.eq.s32.totalorder %s27, 7
      %p59 = por %p57, %p58
      %p60 = scmp.ne.s32.totalorder %s49, %s50
      %p61 = scmp.eq.s32.totalorder %s27, 0
      %p62 = por %p60, %p61
      %p63 = scmp.ne.s32.totalorder %s49, %s50
      %p64 = scmp.eq.s32.totalorder %s28, 7
      %p65 = por %p63, %p64
      %p67 = scmp.ne.s32.totalorder %s50, %s66
      %p68 = scmp.eq.s32.totalorder %s28, 0
      %p69 = por %p67, %p68
      %s70 = ssub.s32 %s30, %s37
      %p71 = scmp.eq.s32.totalorder %s70, 0
      %s73 = sadd.s32 %s72, 1
      %s74 = scalar_select %p71, %s72, %s73
      %p77 = pneg %p71
      %p78 = scmp.eq.s32.totalorder %s22, 7
      %p79 = por %p77, %p78
      %p80 = scmp.ne.s32.totalorder %s72, %s75
      %p81 = scmp.eq.s32.totalorder %s22, 0
      %p82 = por %p80, %p81
      %p83 = scmp.ne.s32.totalorder %s72, %s75
      %p84 = scmp.eq.s32.totalorder %s27, 7
      %p85 = por %p83, %p84
      %p86 = scmp.ne.s32.totalorder %s75, %s76
      %p87 = scmp.eq.s32.totalorder %s27, 0
      %p88 = por %p86, %p87
      %p89 = scmp.ne.s32.totalorder %s75, %s76
      %p90 = scmp.eq.s32.totalorder %s28, 7
      %p91 = por %p89, %p90
      %p93 = scmp.ne.s32.totalorder %s76, %s92
      %p94 = scmp.eq.s32.totalorder %s28, 0
      %p95 = por %p93, %p94
      %s97 = sadd.s32 %s96, 1
      %p100 = scmp.eq.s32.totalorder %s22, 7
      %p101 = scmp.ne.s32.totalorder %s96, %s98
      %p102 = scmp.eq.s32.totalorder %s22, 0
      %p103 = por %p101, %p102
      %p104 = scmp.ne.s32.totalorder %s96, %s98
      %p105 = scmp.eq.s32.totalorder %s27, 7
      %p106 = por %p104, %p105
      %p107 = scmp.ne.s32.totalorder %s98, %s99
      %p108 = scmp.eq.s32.totalorder %s27, 0
      %p109 = por %p107, %p108
      %p110 = scmp.ne.s32.totalorder %s98, %s99
      %p111 = scmp.eq.s32.totalorder %s28, 7
      %p112 = por %p110, %p111
      %p114 = scmp.ne.s32.totalorder %s99, %s113
      %p115 = scmp.eq.s32.totalorder %s28, 0
      %p116 = por %p114, %p115
      %s118 = sadd.s32 %s117, 1
      %p121 = scmp.eq.s32.totalorder %s22, 7
      %p122 = scmp.ne.s32.totalorder %s117, %s119
      %p123 = scmp.eq.s32.totalorder %s22, 0
      %p124 = por %p122, %p123
      %p125 = scmp.ne.s32.totalorder %s117, %s119
      %p126 = scmp.eq.s32.totalorder %s27, 7
      %p127 = por %p125, %p126
      %p128 = scmp.ne.s32.totalorder %s119, %s120
      %p129 = scmp.eq.s32.totalorder %s27, 0
      %p130 = por %p128, %p129
      %p131 = scmp.ne.s32.totalorder %s119, %s120
      %p132 = scmp.eq.s32.totalorder %s28, 7
      %p133 = por %p131, %p132
      %p135 = scmp.ne.s32.totalorder %s120, %s134
      %p136 = scmp.eq.s32.totalorder %s28, 0
      %p137 = por %p135, %p136
      %s139 = sadd.s32 %s138, 1
      %p142 = scmp.eq.s32.totalorder %s22, 7
      %p143 = scmp.ne.s32.totalorder %s138, %s140
      %p144 = scmp.eq.s32.totalorder %s22, 0
      %p145 = por %p143, %p144
      %p146 = scmp.ne.s32.totalorder %s138, %s140
      %p147 = scmp.eq.s32.totalorder %s27, 7
      %p148 = por %p146, %p147
      %p149 = scmp.ne.s32.totalorder %s140, %s141
      %p150 = scmp.eq.s32.totalorder %s27, 0
      %p151 = por %p149, %p150
      %p152 = scmp.ne.s32.totalorder %s140, %s141
      %p153 = scmp.eq.s32.totalorder %s28, 7
      %p154 = por %p152, %p153
      %p156 = scmp.ne.s32.totalorder %s141, %s155
      %p157 = scmp.eq.s32.totalorder %s28, 0
      %p158 = por %p156, %p157
      %s160 = sadd.s32 %s159, 1
      %p163 = scmp.eq.s32.totalorder %s22, 7
      %p164 = scmp.ne.s32.totalorder %s159, %s161
      %p165 = scmp.eq.s32.totalorder %s22, 0
      %p166 = por %p164, %p165
      %p167 = scmp.ne.s32.totalorder %s159, %s161
      %p168 = scmp.eq.s32.totalorder %s27, 7
      %p169 = por %p167, %p168
      %p170 = scmp.ne.s32.totalorder %s161, %s162
      %p171 = scmp.eq.s32.totalorder %s27, 0
      %p172 = por %p170, %p171
      %p173 = scmp.ne.s32.totalorder %s161, %s162
      %p174 = scmp.eq.s32.totalorder %s28, 7
      %p175 = por %p173, %p174
      %p177 = scmp.ne.s32.totalorder %s162, %s176
      %p178 = scmp.eq.s32.totalorder %s28, 0
      %p179 = por %p177, %p178
      %s181 = sadd.s32 %s180, 1
      %p184 = scmp.eq.s32.totalorder %s22, 7
      %p185 = scmp.ne.s32.totalorder %s180, %s182
      %p186 = scmp.eq.s32.totalorder %s22, 0
      %p187 = por %p185, %p186
      %p188 = scmp.ne.s32.totalorder %s180, %s182
      %p189 = scmp.eq.s32.totalorder %s27, 7
      %p190 = por %p188, %p189
      %p191 = scmp.ne.s32.totalorder %s182, %s183
      %p192 = scmp.eq.s32.totalorder %s27, 0
      %p193 = por %p191, %p192
      %p194 = scmp.ne.s32.totalorder %s182, %s183
      %p195 = scmp.eq.s32.totalorder %s28, 7
      %p196 = por %p194, %p195
      %p198 = scmp.ne.s32.totalorder %s183, %s197
      %p199 = scmp.eq.s32.totalorder %s28, 0
      %p200 = por %p198, %p199
      %s201 = ssub.s32 %s29, %s41
      %p202 = scmp.eq.s32.totalorder %s201, 0
      %s204 = sadd.s32 %s203, 1
      %s205 = scalar_select %p202, %s203, %s204
      %p208 = pneg %p202
      %p209 = scmp.eq.s32.totalorder %s22, 7
      %p210 = por %p208, %p209
      %p211 = scmp.ne.s32.totalorder %s203, %s206
      %p212 = scmp.eq.s32.totalorder %s22, 0
      %p213 = por %p211, %p212
      %p214 = scmp.ne.s32.totalorder %s203, %s206
      %p215 = scmp.eq.s32.totalorder %s27, 7
      %p216 = por %p214, %p215
      %p217 = scmp.ne.s32.totalorder %s206, %s207
      %p218 = scmp.eq.s32.totalorder %s27, 0
      %p219 = por %p217, %p218
      %p220 = scmp.ne.s32.totalorder %s206, %s207
      %p221 = scmp.eq.s32.totalorder %s28, 7
      %p222 = por %p220, %p221
      %p224 = scmp.ne.s32.totalorder %s207, %s223
      %p225 = scmp.eq.s32.totalorder %s28, 0
      %p226 = por %p224, %p225
      %p227 = scmp.le.s32.totalorder 1, %s22
      %p228 = scmp.lt.s32.totalorder %s22, 9
      %p229 = pnand %p227, %p228
      %p230 = pneg %p229
      // Predicated region
      $region9: #{tpu_custom_call.1} parent=5 // pred_check
        _
      $region10: #{tpu_custom_call.1} parent=5 // pred_check_branch
        %232 = sbr.rel (%p229) target = $region12
      $region11: #{tpu_custom_call.1} parent=5 // pred_region
        %s233 = ssub.s32 %s22, 1
        // Predicated region
        $region13: #{tpu_custom_call.1} parent=11 // pred_check
          %p234 = pneg %p109
        $region14: #{tpu_custom_call.1} parent=11 // pred_check_branch
          %236 = sbr.rel (%p234) target = $region16
        $region15: #{tpu_custom_call.1} parent=11 // pred_region
          %s238 = ssub.s32 32, 32
          %239 = vsyncadd [#allocation7], %s238
          %s241 = sshll.u32 [#allocation8], 4
          %s242 = int_to_ptr.vmem [resolvable:$true] %s241
          %244 = dma.hbm_to_vmem [thread:$0]  %s2, 32, %s242, [#allocation7]
        $region16: #{tpu_custom_call.1} parent=11 // pred_fallthru
          _
        // Predicated region
        $region17: #{tpu_custom_call.1} parent=11 // pred_check
          %p245 = pneg %p130
        $region18: #{tpu_custom_call.1} parent=11 // pred_check_branch
          %247 = sbr.rel (%p245) target = $region20
        $region19: #{tpu_custom_call.1} parent=11 // pred_region
          _
        $region20: #{tpu_custom_call.1} parent=11 // pred_fallthru
          _
        // Predicated region
        $region21: #{tpu_custom_call.1} parent=11 // pred_check
          %p248 = pneg %p151
        $region22: #{tpu_custom_call.1} parent=11 // pred_check_branch
          %250 = sbr.rel (%p248) target = $region24
        $region23: #{tpu_custom_call.1} parent=11 // pred_region
          %s252 = ssub.s32 16, 16
          %253 = vsyncadd [#allocation10], %s252
          %s255 = sshll.u32 [#allocation9], 4
          %s256 = int_to_ptr.vmem [resolvable:$true] %s255
          %258 = dma.hbm_to_vmem [thread:$0]  %s4, 16, %s256, [#allocation10]
        $region24: #{tpu_custom_call.1} parent=11 // pred_fallthru
          _
        // Predicated region
        $region25: #{tpu_custom_call.1} parent=11 // pred_check
          %p259 = pneg %p172
        $region26: #{tpu_custom_call.1} parent=11 // pred_check_branch
          %261 = sbr.rel (%p259) target = $region28
        $region27: #{tpu_custom_call.1} parent=11 // pred_region
          %s263 = ssub.s32 128, 128
          %264 = vsyncadd [#allocation10], %s263
          %s265 = sshll.u32 [#allocation11], 4
          %s266 = int_to_ptr.vmem [resolvable:$true] %s265
          %271 = dma.hbm_to_vmem [thread:$0]  %s5, 128, %s266, [#allocation10], 64, 64, 4
        $region28: #{tpu_custom_call.1} parent=11 // pred_fallthru
          _
        // Predicated region
        $region29: #{tpu_custom_call.1} parent=11 // pred_check
          %p272 = pneg %p193
        $region30: #{tpu_custom_call.1} parent=11 // pred_check_branch
          %274 = sbr.rel (%p272) target = $region32
        $region31: #{tpu_custom_call.1} parent=11 // pred_region
          %s276 = ssub.s32 16, 16
          %277 = vsyncadd [#allocation13], %s276
          %s279 = sshll.u32 [#allocation12], 4
          %s280 = int_to_ptr.vmem [resolvable:$true] %s279
          %282 = dma.hbm_to_vmem [thread:$0]  %s6, 16, %s280, [#allocation13]
        $region32: #{tpu_custom_call.1} parent=11 // pred_fallthru
          _
      $region12: #{tpu_custom_call.1} parent=5 // pred_fallthru
        _
      %p283 = scmp.lt.s32.totalorder %s22, 8
      // Predicated region
      $region33: #{tpu_custom_call.1} parent=5 // pred_check
        %p284 = pneg %p283
      $region34: #{tpu_custom_call.1} parent=5 // pred_check_branch
        %286 = sbr.rel (%p284) target = $region36
      $region35: #{tpu_custom_call.1} parent=5 // pred_region
        // Predicated region
        $region37: #{tpu_custom_call.1} parent=35 // pred_check
          %p287 = pneg %p56
        $region38: #{tpu_custom_call.1} parent=35 // pred_check_branch
          %289 = sbr.rel (%p287) target = $region40
        $region39: #{tpu_custom_call.1} parent=35 // pred_region
          %s290 = sand.u32 %s46, 1
          %s291 = scalar_lea.sflag [#allocation4], %s290
          %s292 = sand.u32 %s46, 1
          %s293 = smul.addr %s292, 16
          %s294 = scalar_lea.vmem [#allocation3], %s293
          %s295 = smul.u32 4, %s30
          %s297 = ssub.s32 256, 256
          %298 = vsyncadd %s291, %s297
          %s299 = smul.addr %s29, 32
          %s300 = sadd.s32 %s295, %s299
          %s301 = smul.addr %s300, 64
          %s302 = scalar_lea.hbm %s0, %s301
          %s304 = sshll.u32 %s294, 4
          %s305 = int_to_ptr.vmem [resolvable:$true] %s304
          %307 = dma.hbm_to_vmem [thread:$0]  %s302, 256, %s305, %s291
        $region40: #{tpu_custom_call.1} parent=35 // pred_fallthru
          _
        // Predicated region
        $region41: #{tpu_custom_call.1} parent=35 // pred_check
          %p308 = pneg %p82
        $region42: #{tpu_custom_call.1} parent=35 // pred_check_branch
          %310 = sbr.rel (%p308) target = $region44
        $region43: #{tpu_custom_call.1} parent=35 // pred_region
          %s311 = sand.u32 %s22, 1
          %s312 = scalar_lea.sflag [#allocation7], %s311
          %s313 = sand.u32 %s72, 1
          %s314 = smul.addr %s313, 512
          %s315 = scalar_lea.vmem [#allocation6], %s314
          %s316 = smul.u32 64, %s30
          %s318 = ssub.s32 8192, 8192
          %319 = vsyncadd %s312, %s318
          %s320 = smul.addr %s316, 2
          %s321 = smul.addr %s320, 64
          %s322 = scalar_lea.hbm %s1, %s321
          %s323 = sshll.u32 %s315, 4
          %s324 = int_to_ptr.vmem [resolvable:$true] %s323
          %329 = dma.hbm_to_vmem [thread:$0]  %s322, 8192, %s324, %s312, 128, 128, 8
        $region44: #{tpu_custom_call.1} parent=35 // pred_fallthru
          _
      $region36: #{tpu_custom_call.1} parent=5 // pred_fallthru
        _
      %p330 = scmp.le.s32.totalorder 1, %s22
      %p331 = scmp.lt.s32.totalorder %s22, 9
      %p332 = pnand %p330, %p331
      %p333 = pneg %p332
      // Predicated region
      $region45: #{tpu_custom_call.1} parent=5 // pred_check
        _
      $region46: #{tpu_custom_call.1} parent=5 // pred_check_branch
        %335 = sbr.rel (%p332) target = $region48
      $region47: #{tpu_custom_call.1} parent=5 // pred_region
        %s336 = ssub.s32 %s22, 1
        %s337 = sand.u32 %s49, 1
        %s338 = scalar_lea.sflag [#allocation4], %s337
        %s339 = sand.u32 %s49, 1
        %s340 = smul.addr %s339, 16
        %s341 = scalar_lea.vmem [#allocation3], %s340
        // Predicated region
        $region49: #{tpu_custom_call.1} parent=47 // pred_check
          %p342 = pneg %p62
        $region50: #{tpu_custom_call.1} parent=47 // pred_check_branch
          %344 = sbr.rel (%p342) target = $region52
        $region51: #{tpu_custom_call.1} parent=47 // pred_region
          %345 = dma.done %s338, 256
        $region52: #{tpu_custom_call.1} parent=47 // pred_fallthru
          _
        %s346 = sand.u32 %s27, 1
        %s347 = scalar_lea.sflag [#allocation7], %s346
        %s348 = sand.u32 %s75, 1
        %s349 = smul.addr %s348, 512
        %s350 = scalar_lea.vmem [#allocation6], %s349
        // Predicated region
        $region53: #{tpu_custom_call.1} parent=47 // pred_check
          %p351 = pneg %p88
        $region54: #{tpu_custom_call.1} parent=47 // pred_check_branch
          %353 = sbr.rel (%p351) target = $region56
        $region55: #{tpu_custom_call.1} parent=47 // pred_region
          %354 = dma.done %s347, 8192
        $region56: #{tpu_custom_call.1} parent=47 // pred_fallthru
          _
        // Predicated region
        $region57: #{tpu_custom_call.1} parent=47 // pred_check
          %p355 = pneg %p109
        $region58: #{tpu_custom_call.1} parent=47 // pred_check_branch
          %357 = sbr.rel (%p355) target = $region60
        $region59: #{tpu_custom_call.1} parent=47 // pred_region
          %358 = dma.done [#allocation7], 32
        $region60: #{tpu_custom_call.1} parent=47 // pred_fallthru
          _
        // Predicated region
        $region61: #{tpu_custom_call.1} parent=47 // pred_check
          %p359 = pneg %p151
        $region62: #{tpu_custom_call.1} parent=47 // pred_check_branch
          %361 = sbr.rel (%p359) target = $region64
        $region63: #{tpu_custom_call.1} parent=47 // pred_region
          %362 = dma.done [#allocation10], 16
        $region64: #{tpu_custom_call.1} parent=47 // pred_fallthru
          _
        // Predicated region
        $region65: #{tpu_custom_call.1} parent=47 // pred_check
          %p363 = pneg %p172
        $region66: #{tpu_custom_call.1} parent=47 // pred_check_branch
          %365 = sbr.rel (%p363) target = $region68
        $region67: #{tpu_custom_call.1} parent=47 // pred_region
          %366 = dma.done [#allocation10], 128
        $region68: #{tpu_custom_call.1} parent=47 // pred_fallthru
          _
        // Predicated region
        $region69: #{tpu_custom_call.1} parent=47 // pred_check
          %p367 = pneg %p193
        $region70: #{tpu_custom_call.1} parent=47 // pred_check_branch
          %369 = sbr.rel (%p367) target = $region72
        $region71: #{tpu_custom_call.1} parent=47 // pred_region
          %370 = dma.done [#allocation13], 16
        $region72: #{tpu_custom_call.1} parent=47 // pred_fallthru
          _
        %s371 = sand.u32 %s49, 1
        %s372 = scalar_lea.sflag [#allocation4], %s371
        %s373 = sand.u32 %s49, 1
        %s374 = smul.addr %s373, 16
        %s375 = scalar_lea.vmem [#allocation3], %s374
        %p376 = pneg %p62
        %p377 = pneg %p59
        %s378 = sand.u32 %s27, 1
        %s379 = scalar_lea.sflag [#allocation7], %s378
        %s380 = sand.u32 %s75, 1
        %s381 = smul.addr %s380, 512
        %s382 = scalar_lea.vmem [#allocation6], %s381
        %p383 = pneg %p88
        %p384 = pneg %p85
        %p385 = pneg %p109
        %p386 = pneg %p106
        %p387 = pneg %p130
        %p388 = pneg %p127
        %p389 = pneg %p151
        %p390 = pneg %p148
        %p391 = pneg %p172
        %p392 = pneg %p169
        %p393 = pneg %p193
        %p394 = pneg %p190
        %p395 = pneg %p219
        %p396 = pneg %p216
        %s397 = smul.u32 4, %s32
        %s398 = smul.u32 64, %s32
        %p400 = scmp.eq.s32.totalorder %s32, 0
        // Predicated region
        $region73: #{tpu_custom_call.1} parent=47 // pred_check
          %p401 = pneg %p400
        $region74: #{tpu_custom_call.1} parent=47 // pred_check_branch
          %403 = sbr.rel (%p401) target = $region76
        $region75: #{tpu_custom_call.1} parent=47 // pred_region
          %v404 = vld [vmem:[#allocation8] sm:$0x3]
          %v406 = vlaneseq
          %v407 = vshrl.u32 %v406, 7
          %v408 = vsub.s32 0, %v407
          %v409 = vrot.slane %v404, %v408
          %v410 = vlaneseq
          %v411 = vshrl.u32 %v410, 7
          %v412 = vsub.s32 1, %v411
          %v413 = vrot.slane %v404, %v412
          %416 = vst [vmem:[#allocation2] sm:$0xff] %v409
          %417 = vst [vmem:[#allocation2 + $0x8] sm:$0xff] %v413
        $region76: #{tpu_custom_call.1} parent=47 // pred_fallthru
          _
        %v418 = vld [vmem:[#allocation2] sm:$0xff]
        %v419 = vld [vmem:[#allocation2 + $0x8] sm:$0xff]
        %v420 = vld [vmem:[%s341] sm:$0xff]
        %v421 = vld [vmem:[%s341 + $0x8] sm:$0xff]
        %v422 = vld [vmem:[%s350] sm:$0xff]
        %v423 = vld [vmem:[%s350 + $0x8] sm:$0xff]
        %v424 = vld [vmem:[%s350 + $0x10] sm:$0xff]
        %v425 = vld [vmem:[%s350 + $0x18] sm:$0xff]
        %v426 = vld [vmem:[%s350 + $0x20] sm:$0xff]
        %v427 = vld [vmem:[%s350 + $0x28] sm:$0xff]
        %v428 = vld [vmem:[%s350 + $0x30] sm:$0xff]
        %v429 = vld [vmem:[%s350 + $0x38] sm:$0xff]
        %v430 = vld [vmem:[%s350 + $0x40] sm:$0xff]
        %v431 = vld [vmem:[%s350 + $0x48] sm:$0xff]
        %v432 = vld [vmem:[%s350 + $0x50] sm:$0xff]
        %v433 = vld [vmem:[%s350 + $0x58] sm:$0xff]
        %v434 = vld [vmem:[%s350 + $0x60] sm:$0xff]
        %v435 = vld [vmem:[%s350 + $0x68] sm:$0xff]
        %v436 = vld [vmem:[%s350 + $0x70] sm:$0xff]
        %v437 = vld [vmem:[%s350 + $0x78] sm:$0xff]
        %v438 = vld [vmem:[%s350 + $0x80] sm:$0xff]
        %v439 = vld [vmem:[%s350 + $0x88] sm:$0xff]
        %v440 = vld [vmem:[%s350 + $0x90] sm:$0xff]
        %v441 = vld [vmem:[%s350 + $0x98] sm:$0xff]
        %v442 = vld [vmem:[%s350 + $0xa0] sm:$0xff]
        %v443 = vld [vmem:[%s350 + $0xa8] sm:$0xff]
        %v444 = vld [vmem:[%s350 + $0xb0] sm:$0xff]
        %v445 = vld [vmem:[%s350 + $0xb8] sm:$0xff]
        %v446 = vld [vmem:[%s350 + $0xc0] sm:$0xff]
        %v447 = vld [vmem:[%s350 + $0xc8] sm:$0xff]
        %v448 = vld [vmem:[%s350 + $0xd0] sm:$0xff]
        %v449 = vld [vmem:[%s350 + $0xd8] sm:$0xff]
        %v450 = vld [vmem:[%s350 + $0xe0] sm:$0xff]
        %v451 = vld [vmem:[%s350 + $0xe8] sm:$0xff]
        %v452 = vld [vmem:[%s350 + $0xf0] sm:$0xff]
        %v453 = vld [vmem:[%s350 + $0xf8] sm:$0xff]
        %v454 = vld [vmem:[%s350 + $0x100] sm:$0xff]
        %v455 = vld [vmem:[%s350 + $0x108] sm:$0xff]
        %v456 = vld [vmem:[%s350 + $0x110] sm:$0xff]
        %v457 = vld [vmem:[%s350 + $0x118] sm:$0xff]
        %v458 = vld [vmem:[%s350 + $0x120] sm:$0xff]
        %v459 = vld [vmem:[%s350 + $0x128] sm:$0xff]
        %v460 = vld [vmem:[%s350 + $0x130] sm:$0xff]
        %v461 = vld [vmem:[%s350 + $0x138] sm:$0xff]
        %v462 = vld [vmem:[%s350 + $0x140] sm:$0xff]
        %v463 = vld [vmem:[%s350 + $0x148] sm:$0xff]
        %v464 = vld [vmem:[%s350 + $0x150] sm:$0xff]
        %v465 = vld [vmem:[%s350 + $0x158] sm:$0xff]
        %v466 = vld [vmem:[%s350 + $0x160] sm:$0xff]
        %v467 = vld [vmem:[%s350 + $0x168] sm:$0xff]
        %v468 = vld [vmem:[%s350 + $0x170] sm:$0xff]
        %v469 = vld [vmem:[%s350 + $0x178] sm:$0xff]
        %v470 = vld [vmem:[%s350 + $0x180] sm:$0xff]
        %v471 = vld [vmem:[%s350 + $0x188] sm:$0xff]
        %v472 = vld [vmem:[%s350 + $0x190] sm:$0xff]
        %v473 = vld [vmem:[%s350 + $0x198] sm:$0xff]
        %v474 = vld [vmem:[%s350 + $0x1a0] sm:$0xff]
        %v475 = vld [vmem:[%s350 + $0x1a8] sm:$0xff]
        %v476 = vld [vmem:[%s350 + $0x1b0] sm:$0xff]
        %v477 = vld [vmem:[%s350 + $0x1b8] sm:$0xff]
        %v478 = vld [vmem:[%s350 + $0x1c0] sm:$0xff]
        %v479 = vld [vmem:[%s350 + $0x1c8] sm:$0xff]
        %v480 = vld [vmem:[%s350 + $0x1d0] sm:$0xff]
        %v481 = vld [vmem:[%s350 + $0x1d8] sm:$0xff]
        %v482 = vld [vmem:[%s350 + $0x1e0] sm:$0xff]
        %v483 = vld [vmem:[%s350 + $0x1e8] sm:$0xff]
        %v484 = vld [vmem:[%s350 + $0x1f0] sm:$0xff]
        %v485 = vld [vmem:[%s350 + $0x1f8] sm:$0xff]
        %v488 = vunpack.c.l.b16 %v420
        %v489 = vunpack.c.h.b16 %v420
        %v490 = vunpack.c.l.b16 %v421
        %v491 = vunpack.c.h.b16 %v421
        %v492 = vpack.c.b16 %v488, %v488
        %v493 = vpack.c.b16 %v489, %v489
        %v494 = vpack.c.b16 %v490, %v490
        %v495 = vpack.c.b16 %v491, %v491
        %v564 = vunpack.c.l.b16 %v422
        %v565 = vunpack.c.h.b16 %v422
        %v566 = vunpack.c.l.b16 %v423
        %v567 = vunpack.c.h.b16 %v423
        %v568 = vunpack.c.l.b16 %v424
        %v569 = vunpack.c.h.b16 %v424
        %v570 = vunpack.c.l.b16 %v425
        %v571 = vunpack.c.h.b16 %v425
        %v572 = vunpack.c.l.b16 %v426
        %v573 = vunpack.c.h.b16 %v426
        %v574 = vunpack.c.l.b16 %v427
        %v575 = vunpack.c.h.b16 %v427
        %v576 = vunpack.c.l.b16 %v428
        %v577 = vunpack.c.h.b16 %v428
        %v578 = vunpack.c.l.b16 %v429
        %v579 = vunpack.c.h.b16 %v429
        %v580 = vunpack.c.l.b16 %v430
        %v581 = vunpack.c.h.b16 %v430
        %v582 = vunpack.c.l.b16 %v431
        %v583 = vunpack.c.h.b16 %v431
        %v584 = vunpack.c.l.b16 %v432
        %v585 = vunpack.c.h.b16 %v432
        %v586 = vunpack.c.l.b16 %v433
        %v587 = vunpack.c.h.b16 %v433
        %v588 = vunpack.c.l.b16 %v434
        %v589 = vunpack.c.h.b16 %v434
        %v590 = vunpack.c.l.b16 %v435
        %v591 = vunpack.c.h.b16 %v435
        %v592 = vunpack.c.l.b16 %v436
        %v593 = vunpack.c.h.b16 %v436
        %v594 = vunpack.c.l.b16 %v437
        %v595 = vunpack.c.h.b16 %v437
        %v596 = vunpack.c.l.b16 %v438
        %v597 = vunpack.c.h.b16 %v438
        %v598 = vunpack.c.l.b16 %v439
        %v599 = vunpack.c.h.b16 %v439
        %v600 = vunpack.c.l.b16 %v440
        %v601 = vunpack.c.h.b16 %v440
        %v602 = vunpack.c.l.b16 %v441
        %v603 = vunpack.c.h.b16 %v441
        %v604 = vunpack.c.l.b16 %v442
        %v605 = vunpack.c.h.b16 %v442
        %v606 = vunpack.c.l.b16 %v443
        %v607 = vunpack.c.h.b16 %v443
        %v608 = vunpack.c.l.b16 %v444
        %v609 = vunpack.c.h.b16 %v444
        %v610 = vunpack.c.l.b16 %v445
        %v611 = vunpack.c.h.b16 %v445
        %v612 = vunpack.c.l.b16 %v446
        %v613 = vunpack.c.h.b16 %v446
        %v614 = vunpack.c.l.b16 %v447
        %v615 = vunpack.c.h.b16 %v447
        %v616 = vunpack.c.l.b16 %v448
        %v617 = vunpack.c.h.b16 %v448
        %v618 = vunpack.c.l.b16 %v449
        %v619 = vunpack.c.h.b16 %v449
        %v620 = vunpack.c.l.b16 %v450
        %v621 = vunpack.c.h.b16 %v450
        %v622 = vunpack.c.l.b16 %v451
        %v623 = vunpack.c.h.b16 %v451
        %v624 = vunpack.c.l.b16 %v452
        %v625 = vunpack.c.h.b16 %v452
        %v626 = vunpack.c.l.b16 %v453
        %v627 = vunpack.c.h.b16 %v453
        %v628 = vunpack.c.l.b16 %v454
        %v629 = vunpack.c.h.b16 %v454
        %v630 = vunpack.c.l.b16 %v455
        %v631 = vunpack.c.h.b16 %v455
        %v632 = vunpack.c.l.b16 %v456
        %v633 = vunpack.c.h.b16 %v456
        %v634 = vunpack.c.l.b16 %v457
        %v635 = vunpack.c.h.b16 %v457
        %v636 = vunpack.c.l.b16 %v458
        %v637 = vunpack.c.h.b16 %v458
        %v638 = vunpack.c.l.b16 %v459
        %v639 = vunpack.c.h.b16 %v459
        %v640 = vunpack.c.l.b16 %v460
        %v641 = vunpack.c.h.b16 %v460
        %v642 = vunpack.c.l.b16 %v461
        %v643 = vunpack.c.h.b16 %v461
        %v644 = vunpack.c.l.b16 %v462
        %v645 = vunpack.c.h.b16 %v462
        %v646 = vunpack.c.l.b16 %v463
        %v647 = vunpack.c.h.b16 %v463
        %v648 = vunpack.c.l.b16 %v464
        %v649 = vunpack.c.h.b16 %v464
        %v650 = vunpack.c.l.b16 %v465
        %v651 = vunpack.c.h.b16 %v465
        %v652 = vunpack.c.l.b16 %v466
        %v653 = vunpack.c.h.b16 %v466
        %v654 = vunpack.c.l.b16 %v467
        %v655 = vunpack.c.h.b16 %v467
        %v656 = vunpack.c.l.b16 %v468
        %v657 = vunpack.c.h.b16 %v468
        %v658 = vunpack.c.l.b16 %v469
        %v659 = vunpack.c.h.b16 %v469
        %v660 = vunpack.c.l.b16 %v470
        %v661 = vunpack.c.h.b16 %v470
        %v662 = vunpack.c.l.b16 %v471
        %v663 = vunpack.c.h.b16 %v471
        %v664 = vunpack.c.l.b16 %v472
        %v665 = vunpack.c.h.b16 %v472
        %v666 = vunpack.c.l.b16 %v473
        %v667 = vunpack.c.h.b16 %v473
        %v668 = vunpack.c.l.b16 %v474
        %v669 = vunpack.c.h.b16 %v474
        %v670 = vunpack.c.l.b16 %v475
        %v671 = vunpack.c.h.b16 %v475
        %v672 = vunpack.c.l.b16 %v476
        %v673 = vunpack.c.h.b16 %v476
        %v674 = vunpack.c.l.b16 %v477
        %v675 = vunpack.c.h.b16 %v477
        %v676 = vunpack.c.l.b16 %v478
        %v677 = vunpack.c.h.b16 %v478
        %v678 = vunpack.c.l.b16 %v479
        %v679 = vunpack.c.h.b16 %v479
        %v680 = vunpack.c.l.b16 %v480
        %v681 = vunpack.c.h.b16 %v480
        %v682 = vunpack.c.l.b16 %v481
        %v683 = vunpack.c.h.b16 %v481
        %v684 = vunpack.c.l.b16 %v482
        %v685 = vunpack.c.h.b16 %v482
        %v686 = vunpack.c.l.b16 %v483
        %v687 = vunpack.c.h.b16 %v483
        %v688 = vunpack.c.l.b16 %v484
        %v689 = vunpack.c.h.b16 %v484
        %v690 = vunpack.c.l.b16 %v485
        %v691 = vunpack.c.h.b16 %v485
        %v692 = vpack.c.b16 %v566, %v564
        %v693 = vpack.c.b16 %v567, %v565
        %v694 = vpack.c.b16 %v570, %v568
        %v695 = vpack.c.b16 %v571, %v569
        %v696 = vpack.c.b16 %v574, %v572
        %v697 = vpack.c.b16 %v575, %v573
        %v698 = vpack.c.b16 %v578, %v576
        %v699 = vpack.c.b16 %v579, %v577
        %v700 = vpack.c.b16 %v582, %v580
        %v701 = vpack.c.b16 %v583, %v581
        %v702 = vpack.c.b16 %v586, %v584
        %v703 = vpack.c.b16 %v587, %v585
        %v704 = vpack.c.b16 %v590, %v588
        %v705 = vpack.c.b16 %v591, %v589
        %v706 = vpack.c.b16 %v594, %v592
        %v707 = vpack.c.b16 %v595, %v593
        %v708 = vpack.c.b16 %v598, %v596
        %v709 = vpack.c.b16 %v599, %v597
        %v710 = vpack.c.b16 %v602, %v600
        %v711 = vpack.c.b16 %v603, %v601
        %v712 = vpack.c.b16 %v606, %v604
        %v713 = vpack.c.b16 %v607, %v605
        %v714 = vpack.c.b16 %v610, %v608
        %v715 = vpack.c.b16 %v611, %v609
        %v716 = vpack.c.b16 %v614, %v612
        %v717 = vpack.c.b16 %v615, %v613
        %v718 = vpack.c.b16 %v618, %v616
        %v719 = vpack.c.b16 %v619, %v617
        %v720 = vpack.c.b16 %v622, %v620
        %v721 = vpack.c.b16 %v623, %v621
        %v722 = vpack.c.b16 %v626, %v624
        %v723 = vpack.c.b16 %v627, %v625
        %v724 = vpack.c.b16 %v630, %v628
        %v725 = vpack.c.b16 %v631, %v629
        %v726 = vpack.c.b16 %v634, %v632
        %v727 = vpack.c.b16 %v635, %v633
        %v728 = vpack.c.b16 %v638, %v636
        %v729 = vpack.c.b16 %v639, %v637
        %v730 = vpack.c.b16 %v642, %v640
        %v731 = vpack.c.b16 %v643, %v641
        %v732 = vpack.c.b16 %v646, %v644
        %v733 = vpack.c.b16 %v647, %v645
        %v734 = vpack.c.b16 %v650, %v648
        %v735 = vpack.c.b16 %v651, %v649
        %v736 = vpack.c.b16 %v654, %v652
        %v737 = vpack.c.b16 %v655, %v653
        %v738 = vpack.c.b16 %v658, %v656
        %v739 = vpack.c.b16 %v659, %v657
        %v740 = vpack.c.b16 %v662, %v660
        %v741 = vpack.c.b16 %v663, %v661
        %v742 = vpack.c.b16 %v666, %v664
        %v743 = vpack.c.b16 %v667, %v665
        %v744 = vpack.c.b16 %v670, %v668
        %v745 = vpack.c.b16 %v671, %v669
        %v746 = vpack.c.b16 %v674, %v672
        %v747 = vpack.c.b16 %v675, %v673
        %v748 = vpack.c.b16 %v678, %v676
        %v749 = vpack.c.b16 %v679, %v677
        %v750 = vpack.c.b16 %v682, %v680
        %v751 = vpack.c.b16 %v683, %v681
        %v752 = vpack.c.b16 %v686, %v684
        %v753 = vpack.c.b16 %v687, %v685
        %v754 = vpack.c.b16 %v690, %v688
        %v755 = vpack.c.b16 %v691, %v689
        %820 = vmatprep.subr.bf16.mxu0 %v693
        %821 = vmatpush1.bf16.msra.mxu0 %v692
        %822 = vmatprep.subr.bf16.mxu0 %v695
        %823 = vmatpush1.bf16.msra.mxu0 %v694
        %824 = vmatprep.subr.bf16.mxu0 %v697
        %825 = vmatpush1.bf16.msra.mxu0 %v696
        %826 = vmatprep.subr.bf16.mxu0 %v699
        %827 = vmatpush1.bf16.msra.mxu0 %v698
        %828 = vmatprep.subr.bf16.mxu0 %v701
        %829 = vmatpush1.bf16.msra.mxu0 %v700
        %830 = vmatprep.subr.bf16.mxu0 %v703
        %831 = vmatpush1.bf16.msra.mxu0 %v702
        %832 = vmatprep.subr.bf16.mxu0 %v705
        %833 = vmatpush1.bf16.msra.mxu0 %v704
        %834 = vmatprep.subr.bf16.mxu0 %v707
        %835 = vmatpush1.bf16.msra.mxu0 %v706
        %836 = vmatprep.subr.bf16.mxu0 %v709
        %837 = vmatpush1.bf16.msra.mxu0 %v708
        %838 = vmatprep.subr.bf16.mxu0 %v711
        %839 = vmatpush1.bf16.msra.mxu0 %v710
        %840 = vmatprep.subr.bf16.mxu0 %v713
        %841 = vmatpush1.bf16.msra.mxu0 %v712
        %842 = vmatprep.subr.bf16.mxu0 %v715
        %843 = vmatpush1.bf16.msra.mxu0 %v714
        %844 = vmatprep.subr.bf16.mxu0 %v717
        %845 = vmatpush1.bf16.msra.mxu0 %v716
        %846 = vmatprep.subr.bf16.mxu0 %v719
        %847 = vmatpush1.bf16.msra.mxu0 %v718
        %848 = vmatprep.subr.bf16.mxu0 %v721
        %849 = vmatpush1.bf16.msra.mxu0 %v720
        %850 = vmatprep.subr.bf16.mxu0 %v723
        %851 = vmatpush1.bf16.msra.mxu0 %v722
        %852 = vmatprep.mubr.bf16.mxu0 %v493
        %853 = vmatmul.mubr.bf16.gmra.mrb[0].mxu0 %v492
        %v854 = vpop.f32.mrb[0].mxu0
        %v855 = vadd.f32 0.0, %v854
        %v856 = vpop.f32.mrb[0].mxu0
        %v857 = vadd.f32 0.0, %v856
        %v858 = vpop.f32.mrb[0].mxu0
        %v859 = vpop.f32.mrb[0].mxu0
        %860 = vdwg.mxu0
        %861 = vmatprep.subr.bf16.mxu0 %v725
        %862 = vmatpush1.bf16.msra.mxu0 %v724
        %863 = vmatprep.subr.bf16.mxu0 %v727
        %864 = vmatpush1.bf16.msra.mxu0 %v726
        %865 = vmatprep.subr.bf16.mxu0 %v729
        %866 = vmatpush1.bf16.msra.mxu0 %v728
        %867 = vmatprep.subr.bf16.mxu0 %v731
        %868 = vmatpush1.bf16.msra.mxu0 %v730
        %869 = vmatprep.subr.bf16.mxu0 %v733
        %870 = vmatpush1.bf16.msra.mxu0 %v732
        %871 = vmatprep.subr.bf16.mxu0 %v735
        %872 = vmatpush1.bf16.msra.mxu0 %v734
        %873 = vmatprep.subr.bf16.mxu0 %v737
        %874 = vmatpush1.bf16.msra.mxu0 %v736
        %875 = vmatprep.subr.bf16.mxu0 %v739
        %876 = vmatpush1.bf16.msra.mxu0 %v738
        %877 = vmatprep.subr.bf16.mxu0 %v741
        %878 = vmatpush1.bf16.msra.mxu0 %v740
        %879 = vmatprep.subr.bf16.mxu0 %v743
        %880 = vmatpush1.bf16.msra.mxu0 %v742
        %881 = vmatprep.subr.bf16.mxu0 %v745
        %882 = vmatpush1.bf16.msra.mxu0 %v744
        %883 = vmatprep.subr.bf16.mxu0 %v747
        %884 = vmatpush1.bf16.msra.mxu0 %v746
        %885 = vmatprep.subr.bf16.mxu0 %v749
        %886 = vmatpush1.bf16.msra.mxu0 %v748
        %887 = vmatprep.subr.bf16.mxu0 %v751
        %888 = vmatpush1.bf16.msra.mxu0 %v750
        %889 = vmatprep.subr.bf16.mxu0 %v753
        %890 = vmatpush1.bf16.msra.mxu0 %v752
        %891 = vmatprep.subr.bf16.mxu0 %v755
        %892 = vmatpush1.bf16.msra.mxu0 %v754
        %893 = vmatprep.mubr.bf16.mxu0 %v495
        %894 = vmatmul.mubr.bf16.gmra.mrb[0].mxu0 %v494
        %v895 = vpop.f32.mrb[0].mxu0
        %v896 = vadd.f32 %v855, %v895
        %v897 = vpop.f32.mrb[0].mxu0
        %v898 = vadd.f32 %v857, %v897
        %v899 = vpop.f32.mrb[0].mxu0
        %v900 = vpop.f32.mrb[0].mxu0
        %901 = vdwg.mxu0
        %v902 = vadd.f32 %v418, %v896
        %v903 = vadd.f32 %v419, %v898
        %904 = vst [vmem:[#allocation2] sm:$0xff] %v902
        %905 = vst [vmem:[#allocation2 + $0x8] sm:$0xff] %v903
        %p906 = scmp.eq.s32.totalorder %s32, 7
        // Predicated region
        $region77: #{tpu_custom_call.1} parent=47 // pred_check
          %p907 = pneg %p906
        $region78: #{tpu_custom_call.1} parent=47 // pred_check_branch
          %909 = sbr.rel (%p907) target = $region80
        $region79: #{tpu_custom_call.1} parent=47 // pred_region
          %v910 = vld [vmem:[#allocation2] sm:$0xff]
          %v911 = vld [vmem:[#allocation2 + $0x8] sm:$0xff]
          %v912 = vmax.f32 %v910, 0.0
          %v913 = vmax.f32 %v911, 0.0
          %v914 = vpack.c.bf16 %v912, %v912
          %v915 = vpack.c.bf16 %v913, %v913
          %v916 = vld [vmem:[%s3] sm:$0xf]
          %v917 = vld [vmem:[%s3 + $0x4] sm:$0xf]
          %v918 = vld [vmem:[%s3 + $0x8] sm:$0xf]
          %v919 = vld [vmem:[%s3 + $0xc] sm:$0xf]
          %v920 = vld [vmem:[%s3 + $0x10] sm:$0xf]
          %v921 = vld [vmem:[%s3 + $0x14] sm:$0xf]
          %v922 = vld [vmem:[%s3 + $0x18] sm:$0xf]
          %v923 = vld [vmem:[%s3 + $0x1c] sm:$0xf]
          %v924 = vld [vmem:[%s3 + $0x20] sm:$0xf]
          %v925 = vld [vmem:[%s3 + $0x24] sm:$0xf]
          %v926 = vld [vmem:[%s3 + $0x28] sm:$0xf]
          %v927 = vld [vmem:[%s3 + $0x2c] sm:$0xf]
          %v928 = vld [vmem:[%s3 + $0x30] sm:$0xf]
          %v929 = vld [vmem:[%s3 + $0x34] sm:$0xf]
          %v930 = vld [vmem:[%s3 + $0x38] sm:$0xf]
          %v931 = vld [vmem:[%s3 + $0x3c] sm:$0xf]
          %v932 = vld [vmem:[%s3 + $0x40] sm:$0xf]
          %v933 = vld [vmem:[%s3 + $0x44] sm:$0xf]
          %v934 = vld [vmem:[%s3 + $0x48] sm:$0xf]
          %v935 = vld [vmem:[%s3 + $0x4c] sm:$0xf]
          %v936 = vld [vmem:[%s3 + $0x50] sm:$0xf]
          %v937 = vld [vmem:[%s3 + $0x54] sm:$0xf]
          %v938 = vld [vmem:[%s3 + $0x58] sm:$0xf]
          %v939 = vld [vmem:[%s3 + $0x5c] sm:$0xf]
          %v940 = vld [vmem:[%s3 + $0x60] sm:$0xf]
          %v941 = vld [vmem:[%s3 + $0x64] sm:$0xf]
          %v942 = vld [vmem:[%s3 + $0x68] sm:$0xf]
          %v943 = vld [vmem:[%s3 + $0x6c] sm:$0xf]
          %v944 = vld [vmem:[%s3 + $0x70] sm:$0xf]
          %v945 = vld [vmem:[%s3 + $0x74] sm:$0xf]
          %v946 = vld [vmem:[%s3 + $0x78] sm:$0xf]
          %v947 = vld [vmem:[%s3 + $0x7c] sm:$0xf]
          %v948 = vld [vmem:[#allocation9] sm:$0x1]
          %v950 = vlaneseq
          %v951 = vshrl.u32 %v950, 7
          %v952 = vsub.s32 0, %v951
          %v953 = vrot.slane %v948, %v952
          %v987 = vunpack.c.l.b16 %v916
          %v988 = vunpack.c.l.b16 %v917
          %v989 = vunpack.c.l.b16 %v918
          %v990 = vunpack.c.l.b16 %v919
          %v991 = vunpack.c.l.b16 %v920
          %v992 = vunpack.c.l.b16 %v921
          %v993 = vunpack.c.l.b16 %v922
          %v994 = vunpack.c.l.b16 %v923
          %v995 = vunpack.c.l.b16 %v924
          %v996 = vunpack.c.l.b16 %v925
          %v997 = vunpack.c.l.b16 %v926
          %v998 = vunpack.c.l.b16 %v927
          %v999 = vunpack.c.l.b16 %v928
          %v1000 = vunpack.c.l.b16 %v929
          %v1001 = vunpack.c.l.b16 %v930
          %v1002 = vunpack.c.l.b16 %v931
          %v1003 = vunpack.c.l.b16 %v932
          %v1004 = vunpack.c.l.b16 %v933
          %v1005 = vunpack.c.l.b16 %v934
          %v1006 = vunpack.c.l.b16 %v935
          %v1007 = vunpack.c.l.b16 %v936
          %v1008 = vunpack.c.l.b16 %v937
          %v1009 = vunpack.c.l.b16 %v938
          %v1010 = vunpack.c.l.b16 %v939
          %v1011 = vunpack.c.l.b16 %v940
          %v1012 = vunpack.c.l.b16 %v941
          %v1013 = vunpack.c.l.b16 %v942
          %v1014 = vunpack.c.l.b16 %v943
          %v1015 = vunpack.c.l.b16 %v944
          %v1016 = vunpack.c.l.b16 %v945
          %v1017 = vunpack.c.l.b16 %v946
          %v1018 = vunpack.c.l.b16 %v947
          %v1019 = vpack.c.b16 %v988, %v987
          %v1020 = vpack.c.b16 %v990, %v989
          %v1021 = vpack.c.b16 %v992, %v991
          %v1022 = vpack.c.b16 %v994, %v993
          %v1023 = vpack.c.b16 %v996, %v995
          %v1024 = vpack.c.b16 %v998, %v997
          %v1025 = vpack.c.b16 %v1000, %v999
          %v1026 = vpack.c.b16 %v1002, %v1001
          %v1027 = vpack.c.b16 %v1004, %v1003
          %v1028 = vpack.c.b16 %v1006, %v1005
          %v1029 = vpack.c.b16 %v1008, %v1007
          %v1030 = vpack.c.b16 %v1010, %v1009
          %v1031 = vpack.c.b16 %v1012, %v1011
          %v1032 = vpack.c.b16 %v1014, %v1013
          %v1033 = vpack.c.b16 %v1016, %v1015
          %v1034 = vpack.c.b16 %v1018, %v1017
          %1051 = vmatprep.subr.bf16.mxu0 0
          %1052 = vmatpush1.bf16.msra.mxu0 %v1019
          %1053 = vmatprep.subr.bf16.mxu0 0
          %1054 = vmatpush1.bf16.msra.mxu0 %v1020
          %1055 = vmatprep.subr.bf16.mxu0 0
          %1056 = vmatpush1.bf16.msra.mxu0 %v1021
          %1057 = vmatprep.subr.bf16.mxu0 0
          %1058 = vmatpush1.bf16.msra.mxu0 %v1022
          %1059 = vmatprep.subr.bf16.mxu0 0
          %1060 = vmatpush1.bf16.msra.mxu0 %v1023
          %1061 = vmatprep.subr.bf16.mxu0 0
          %1062 = vmatpush1.bf16.msra.mxu0 %v1024
          %1063 = vmatprep.subr.bf16.mxu0 0
          %1064 = vmatpush1.bf16.msra.mxu0 %v1025
          %1065 = vmatprep.subr.bf16.mxu0 0
          %1066 = vmatpush1.bf16.msra.mxu0 %v1026
          %1067 = vmatprep.subr.bf16.mxu0 0
          %1068 = vmatpush1.bf16.msra.mxu0 %v1027
          %1069 = vmatprep.subr.bf16.mxu0 0
          %1070 = vmatpush1.bf16.msra.mxu0 %v1028
          %1071 = vmatprep.subr.bf16.mxu0 0
          %1072 = vmatpush1.bf16.msra.mxu0 %v1029
          %1073 = vmatprep.subr.bf16.mxu0 0
          %1074 = vmatpush1.bf16.msra.mxu0 %v1030
          %1075 = vmatprep.subr.bf16.mxu0 0
          %1076 = vmatpush1.bf16.msra.mxu0 %v1031
          %1077 = vmatprep.subr.bf16.mxu0 0
          %1078 = vmatpush1.bf16.msra.mxu0 %v1032
          %1079 = vmatprep.subr.bf16.mxu0 0
          %1080 = vmatpush1.bf16.msra.mxu0 %v1033
          %1081 = vmatprep.subr.bf16.mxu0 0
          %1082 = vmatpush1.bf16.msra.mxu0 %v1034
          %1083 = vmatprep.mubr.bf16.mxu0 %v915
          %1084 = vmatmul.mubr.bf16.gmra.mrb[0].mxu0 %v914
          %v1085 = vpop.f32.mrb[0].mxu0
          %v1086 = vadd.f32 %v953, %v1085
          %v1087 = vpop.f32.mrb[0].mxu0
          %v1088 = vpop.f32.mrb[0].mxu0
          %v1089 = vpop.f32.mrb[0].mxu0
          %1090 = vdwg.mxu0
          %v1091 = vmax.f32 %v1086, 0.0
          %v1092 = vpack.c.bf16 %v1091, %v1091
          %v1093 = vld [vmem:[#allocation11] sm:$0xf]
          %v1094 = vld [vmem:[#allocation11 + $0x4] sm:$0xf]
          %v1095 = vld [vmem:[#allocation12] sm:$0x1]
          %v1097 = vlaneseq
          %v1098 = vshrl.u32 %v1097, 7
          %v1099 = vsub.s32 0, %v1098
          %v1100 = vrot.slane %v1095, %v1099
          %v1104 = vunpack.c.l.b16 %v1093
          %v1105 = vunpack.c.l.b16 %v1094
          %v1106 = vpack.c.b16 %v1105, %v1104
          %vm1108 = vcmask 130048
          %v1110 = vsel %vm1108, %v1092, 0
          %1112 = vmatprep.subr.bf16.mxu0 0
          %1113 = vmatpush1.bf16.msra.mxu0 %v1106
          %1114 = vmatprep.subr.bf16.mxu0 0
          %1115 = vmatpush1.bf16.msra.mxu0 0
          %1116 = vmatprep.subr.bf16.mxu0 0
          %1117 = vmatpush1.bf16.msra.mxu0 0
          %1118 = vmatprep.subr.bf16.mxu0 0
          %1119 = vmatpush1.bf16.msra.mxu0 0
          %1120 = vmatprep.subr.bf16.mxu0 0
          %1121 = vmatpush1.bf16.msra.mxu0 0
          %1122 = vmatprep.subr.bf16.mxu0 0
          %1123 = vmatpush1.bf16.msra.mxu0 0
          %1124 = vmatprep.subr.bf16.mxu0 0
          %1125 = vmatpush1.bf16.msra.mxu0 0
          %1126 = vmatprep.subr.bf16.mxu0 0
          %1127 = vmatpush1.bf16.msra.mxu0 0
          %1128 = vmatprep.subr.bf16.mxu0 0
          %1129 = vmatpush1.bf16.msra.mxu0 0
          %1130 = vmatprep.subr.bf16.mxu0 0
          %1131 = vmatpush1.bf16.msra.mxu0 0
          %1132 = vmatprep.subr.bf16.mxu0 0
          %1133 = vmatpush1.bf16.msra.mxu0 0
          %1134 = vmatprep.subr.bf16.mxu0 0
          %1135 = vmatpush1.bf16.msra.mxu0 0
          %1136 = vmatprep.subr.bf16.mxu0 0
          %1137 = vmatpush1.bf16.msra.mxu0 0
          %1138 = vmatprep.subr.bf16.mxu0 0
          %1139 = vmatpush1.bf16.msra.mxu0 0
          %1140 = vmatprep.subr.bf16.mxu0 0
          %1141 = vmatpush1.bf16.msra.mxu0 0
          %1142 = vmatprep.subr.bf16.mxu0 0
          %1143 = vmatpush1.bf16.msra.mxu0 0
          %1144 = vmatprep.mubr.bf16.mxu0 0
          %1145 = vmatmul.mubr.bf16.gmra.mrb[0].mxu0 %v1110
          %v1146 = vpop.f32.mrb[0].mxu0
          %v1147 = vadd.f32 %v1100, %v1146
          %v1148 = vpop.f32.mrb[0].mxu0
          %v1149 = vpop.f32.mrb[0].mxu0
          %v1150 = vpop.f32.mrb[0].mxu0
          %1151 = vdwg.mxu0
          %1152 = vst [vmem:[#allocation14] sm:$0xff] %v1147
        $region80: #{tpu_custom_call.1} parent=47 // pred_fallthru
          _
        // Predicated region
        $region81: #{tpu_custom_call.1} parent=47 // pred_check
          %p1153 = pneg %p216
        $region82: #{tpu_custom_call.1} parent=47 // pred_check_branch
          %1155 = sbr.rel (%p1153) target = $region84
        $region83: #{tpu_custom_call.1} parent=47 // pred_region
          %s1157 = ssub.s32 128, 128
          %1158 = vsyncadd [#allocation5], %s1157
          %s1159 = smul.addr %s31, 128
          %s1160 = scalar_lea.hbm %s7, %s1159
          %s1162 = sshll.u32 [#allocation14], 4
          %s1163 = int_to_ptr.vmem [resolvable:$true] %s1162
          %1165 = dma.vmem_to_hbm [thread:$0]  %s1163, 128, %s1160, [#allocation5]
        $region84: #{tpu_custom_call.1} parent=47 // pred_fallthru
          _
        // Predicated region
        $region85: #{tpu_custom_call.1} parent=47 // pred_check
          %p1166 = pneg %p216
        $region86: #{tpu_custom_call.1} parent=47 // pred_check_branch
          %1168 = sbr.rel (%p1166) target = $region88
        $region87: #{tpu_custom_call.1} parent=47 // pred_region
          %1169 = dma.done [#allocation5], 128
        $region88: #{tpu_custom_call.1} parent=47 // pred_fallthru
          _
      $region48: #{tpu_custom_call.1} parent=5 // pred_fallthru
        _
      %p1170 = scmp.le.s32.totalorder 2, %s22
      // Predicated region
      $region89: #{tpu_custom_call.1} parent=5 // pred_check
        %p1171 = pneg %p1170
      $region90: #{tpu_custom_call.1} parent=5 // pred_check_branch
        %1173 = sbr.rel (%p1171) target = $region92
      $region91: #{tpu_custom_call.1} parent=5 // pred_region
        %s1174 = ssub.s32 %s22, 2
      $region92: #{tpu_custom_call.1} parent=5 // pred_fallthru
        _
    $region6: #{tpu_custom_call.1} parent=1 // loop_footer
      %s26 = sadd.s32 1, %s22
    $region7: #{tpu_custom_call.1} parent=1 // loop_footer_branch
      %21 = sbr.rel target = $region3
    $region8: #{tpu_custom_call.1} parent=1 // loop_exit
      _
    %1175 = vsyncpa [#allocation4], 1
    %s1176 = scalar_lea.sflag [#allocation4], 1
    %1177 = vsyncpa %s1176, 1
    %1178 = vsyncpa [#allocation7], 1
    %s1179 = scalar_lea.sflag [#allocation7], 1
    %1180 = vsyncpa %s1179, 1
    %1181 = vsyncpa [#allocation10], 1
    %1182 = vsyncpa [#allocation13], 1
    %1183 = vsyncpa [#allocation5], 1
    %s1184 = scalar_lea.sflag [#allocation5], 1
    %1185 = vsyncpa %s1184, 1

</llo_original>
